<compile_context>
chip_gen: v5e
topology: v5e:2x2
jax: 0.10.0
libtpu: 0.0.40
codegen_flags: <defaults>
</compile_context>

<pallas_src>
import functools

import jax
import jax.numpy as jnp
import numpy as np
from jax.experimental import pallas as pl
from jax.experimental.pallas import tpu as pltpu

# 3x3 tap offsets, dy-major / dx-minor.  This ordering is shared by the host-side
# mask builder, the im2col weight packing and the in-kernel tap loop.
_OFFSETS = tuple((dy, dx) for dy in (-1, 0, 1) for dx in (-1, 0, 1))


# ----------------------------------------------------------------------------
# One-time host-side preparation (outside the jitted forward)
# ----------------------------------------------------------------------------
def build_edge_masks(H, W, images_per_step):
    """(9, images_per_step*H*W) f32; mask[t, p] == 1 iff tap t of pixel p stays
    inside its own image.  This implements 'same' zero padding and also kills
    pltpu.roll wrap-around between images folded onto the lane axis."""
    HW = H * W
    npix = images_per_step * HW
    q = np.arange(npix) % HW
    row, col = q // W, q % W
    masks = np.zeros((9, npix), np.float32)
    for t, (dy, dx) in enumerate(_OFFSETS):
        valid = ((row + dy >= 0) & (row + dy < H) &
                 (col + dx >= 0) & (col + dx < W))
        masks[t] = valid.astype(np.float32)
    return jnp.asarray(masks)


def pack_params(params):
    """Pack every weight/bias into one lane-padded f32 slab (single DMA).

    Layout (Cmid rows per conv block, 128-lane padded columns):
      rows [0, Cmid)        : conv1 im2col weights (Cmid, 9*Cin) | bias at col 9*Cin
      rows [Cmid, 2*Cmid)   : conv2 im2col weights (Cmid, 9*Cmid)| bias at col 9*Cmid
      rows [2*Cmid, ..+Cout): conv3 weights        (Cout, Cmid)  | bias at col Cmid
    """
    w1 = np.asarray(params["w1"], np.float32)   # (3,3,Cin,Cmid)  HWIO
    w2 = np.asarray(params["w2"], np.float32)   # (3,3,Cmid,Cmid) HWIO
    w3 = np.asarray(params["w3"], np.float32)   # (Cmid,Cout)
    b1 = np.asarray(params["b1"], np.float32)
    b2 = np.asarray(params["b2"], np.float32)
    b3 = np.asarray(params["b3"], np.float32)
    cin, cmid = w1.shape[2], w1.shape[3]
    cout = w3.shape[1]

    # im2col weights: (Cout, 9*Cin), tap-major / Cin-minor (matches _OFFSETS).
    w1_m = w1.transpose(3, 0, 1, 2).reshape(cmid, 9 * cin)
    w2_m = w2.transpose(3, 0, 1, 2).reshape(cmid, 9 * cmid)
    w3_m = w3.T

    rows = 2 * cmid + ((cout + 7) // 8) * 8
    cols = ((max(9 * cmid, 9 * cin, cmid) + 1 + 127) // 128) * 128
    slab = np.zeros((rows, cols), np.float32)
    slab[0:cmid, 0:9 * cin] = w1_m
    slab[0:cmid, 9 * cin] = b1
    slab[cmid:2 * cmid, 0:9 * cmid] = w2_m
    slab[cmid:2 * cmid, 9 * cmid] = b2
    slab[2 * cmid:2 * cmid + cout, 0:cmid] = w3_m
    slab[2 * cmid:2 * cmid + cout, cmid] = b3
    return jnp.asarray(slab)


def default_images_per_step(batch):
    """v7x (2 TensorCores/chip): keep one image per grid step so the 'parallel'
    batch axis maps one image per core.  Single-TC chips (v5e/v6e): fold the
    whole batch into the lane axis and run a single grid step (per-step overhead
    is a visible fraction of this microsecond-scale kernel)."""
    try:
        kind = jax.devices()[0].device_kind.lower()
    except Exception:
        kind = ""
    return 1 if ("v7" in kind or "7x" in kind) else batch


# ----------------------------------------------------------------------------
# Fused kernel: conv1+ReLU -> conv2+ReLU -> 1x1 conv -> channel softmax
# ----------------------------------------------------------------------------
def fused_segmentation_kernel(mask_ref, x_ref, w_ref, o_ref, patches_ref, *,
                              H, W, cin, cmid, cout, n_imgs):
    # mask_ref   : (9, npix)            per-tap validity masks (shared by both convs)
    # x_ref      : (cin, npix)          n_imgs images, channel-major, pixels on lanes
    # w_ref      : (rows, 128)          packed weight/bias slab
    # o_ref      : (n_imgs, cout, HW)   per-image channel probabilities
    # patches_ref: (9*max(cin,cmid), npix) VMEM scratch for im2col staging
    HW = H * W
    npix = n_imgs * HW
    x = x_ref[...]

    def taps(img):
        """Yield (t, masked 3x3 tap of `img`) for every kernel offset.
        One XLU roll + one VPU multiply per tap; masks come from VMEM."""
        for t, (dy, dx) in enumerate(_OFFSETS):
            off = dy * W + dx
            shifted = img if off == 0 else pltpu.roll(img, (-off) % npix, axis=1)
            yield t, shifted * mask_ref[t:t + 1, :]

    # ---- conv1: 3x3, cin -> cmid, ReLU -------------------------------------
    w1 = w_ref[0:cmid, 0:9 * cin]                        # (cmid, 9*cin)
    b1 = w_ref[0:cmid, 9 * cin:9 * cin + 1]              # (cmid, 1)
    if cin == 1:
        # Degenerate contraction: 9 broadcast-FMAs on the VPU beat a K=9 matmul.
        acc1 = jnp.zeros((cmid, npix), jnp.float32)
        for t, tap in taps(x):
            acc1 = acc1 + w1[:, t:t + 1] * tap           # (cmid,1)*(1,npix)
    else:
        for t, tap in taps(x):
            patches_ref[t * cin:(t + 1) * cin, :] = tap
        acc1 = jnp.dot(w1, patches_ref[0:9 * cin, :],
                       preferred_element_type=jnp.float32)
    h1 = jnp.maximum(acc1 + b1, 0.0)                     # (cmid, npix)

    # ---- conv2: 3x3, cmid -> cmid, ReLU -------------------------------------
    # Stage the 9 masked taps straight into VMEM scratch (sublane-aligned rows),
    # then a single (cmid, 9*cmid) @ (9*cmid, npix) MXU push.
    w2 = w_ref[cmid:2 * cmid, 0:9 * cmid]
    b2 = w_ref[cmid:2 * cmid, 9 * cmid:9 * cmid + 1]
    for t, tap in taps(h1):
        patches_ref[t * cmid:(t + 1) * cmid, :] = tap
    acc2 = jnp.dot(w2, patches_ref[0:9 * cmid, :],
                   preferred_element_type=jnp.float32)
    h2 = jnp.maximum(acc2 + b2, 0.0)                     # (cmid, npix)

    # ---- conv3: 1x1, cmid -> cout --------------------------------------------
    w3 = w_ref[2 * cmid:2 * cmid + cout, 0:cmid]         # (cout, cmid)
    b3 = w_ref[2 * cmid:2 * cmid + cout, cmid:cmid + 1]  # (cout, 1)
    logits = jnp.dot(w3, h2, preferred_element_type=jnp.float32) + b3

    # ---- softmax over the channel axis ---------------------------------------
    if cout == 2:
        # Closed form: one exp (EUP) + a few VPU ops, no cross-sublane reductions;
        # p0 + p1 == 1 exactly.
        d = logits[1:2, :] - logits[0:1, :]
        p1 = 1.0 / (1.0 + jnp.exp(-d))
        probs = (1.0 - p1, p1)
    else:
        m = jnp.max(logits, axis=0, keepdims=True)
        e = jnp.exp(logits - m)
        e = e / jnp.sum(e, axis=0, keepdims=True)
        probs = tuple(e[c:c + 1, :] for c in range(cout))

    # Un-fold: image b occupies lanes [b*HW, (b+1)*HW).  256-lane stores, unmasked.
    for b in range(n_imgs):
        for c in range(cout):
            o_ref[b:b + 1, c:c + 1, :] = (
                probs[c][:, b * HW:(b + 1) * HW].reshape(1, 1, HW))


# ----------------------------------------------------------------------------
# Wrapper
# ----------------------------------------------------------------------------
@functools.partial(jax.jit, static_argnames=("cmid", "cout", "images_per_step"))
def rl_segmentation_forward(x_nchw, packed_w, masks, *, cmid, cout,
                            images_per_step):
    """Forward pass matching RLSegmentationModel: NCHW in, NCHW probabilities out."""
    B, cin, H, W = x_nchw.shape
    HW = H * W
    n_imgs = images_per_step
    if B % n_imgs != 0:
        raise ValueError("batch must be divisible by images_per_step")
    npix = n_imgs * HW
    if masks.shape != (9, npix):
        raise ValueError("edge masks were built for a different fold")

    # NCHW -> channel-major with (batch, pixels) folded onto the lane axis.
    # For cin == 1 this is a free contiguous reshape (no transpose).
    if cin == 1:
        x_folded = x_nchw.reshape(1, B * HW).astype(jnp.float32)
    else:
        x_folded = (x_nchw.reshape(B, cin, HW).transpose(1, 0, 2)
                    .reshape(cin, B * HW).astype(jnp.float32))

    kernel = functools.partial(fused_segmentation_kernel, H=H, W=W, cin=cin,
                               cmid=cmid, cout=cout, n_imgs=n_imgs)

    out = pl.pallas_call(
        kernel,
        out_shape=jax.ShapeDtypeStruct((B, cout, HW), jnp.float32),
        grid_spec=pltpu.PrefetchScalarGridSpec(
            num_scalar_prefetch=0,
            grid=(B // n_imgs,),
            in_specs=[
                pl.BlockSpec((9, npix), lambda g: (0, 0)),        # edge masks
                pl.BlockSpec((cin, npix), lambda g: (0, g)),      # pixels
                pl.BlockSpec(packed_w.shape, lambda g: (0, 0)),   # weight slab
            ],
            out_specs=pl.BlockSpec((n_imgs, cout, HW), lambda g: (g, 0, 0)),
            scratch_shapes=[
                pltpu.VMEM((9 * max(cin, cmid), npix), jnp.float32)],
        ),
        compiler_params=pltpu.CompilerParams(
            dimension_semantics=("parallel",)),   # one image per core on v7x
    )(masks, x_folded, packed_w)

    return out.reshape(B, cout, H, W)


# ----------------------------------------------------------------------------
# Pure-JAX reference (for correctness check only) -- run at HIGHEST precision so
# it is an exact f32 baseline.
# ----------------------------------------------------------------------------
def reference_forward(x_nchw, params):
    x = jnp.transpose(x_nchw, (0, 2, 3, 1)).astype(jnp.float32)

    def conv(x, w, b):
        y = jax.lax.conv_general_dilated(
            x, w, window_strides=(1, 1), padding="SAME",
            dimension_numbers=("NHWC", "HWIO", "NHWC"),
            precision=jax.lax.Precision.HIGHEST)
        return y + b.reshape(1, 1, 1, -1)

    h1 = jax.nn.relu(conv(x, params["w1"], params["b1"]))
    h2 = jax.nn.relu(conv(h1, params["w2"], params["b2"]))
    logits = jnp.einsum("bhwi,io->bhwo", h2, params["w3"],
                        precision=jax.lax.Precision.HIGHEST)
    logits = logits + params["b3"].reshape(1, 1, 1, -1)
    probs = jax.nn.softmax(logits, axis=-1)
    return jnp.transpose(probs, (0, 3, 1, 2))


# ----------------------------------------------------------------------------
# Main
# ----------------------------------------------------------------------------
if __name__ == "__main__":
    B, Cin, H, W = 2, 1, 16, 16
    Cmid, Cout = 8, 2

    key = jax.random.PRNGKey(0)
    k_x, k_w1, k_b1, k_w2, k_b2, k_w3, k_b3 = jax.random.split(key, 7)

    # Deterministic synthetic parameters (HWIO layout for 3x3 convs, (Cin,Cout) for 1x1).
    params = {
        "w1": 0.2 * jax.random.normal(k_w1, (3, 3, Cin, Cmid), jnp.float32),
        "b1": 0.1 * jax.random.normal(k_b1, (Cmid,), jnp.float32),
        "w2": 0.2 * jax.random.normal(k_w2, (3, 3, Cmid, Cmid), jnp.float32),
        "b2": 0.1 * jax.random.normal(k_b2, (Cmid,), jnp.float32),
        "w3": 0.2 * jax.random.normal(k_w3, (Cmid, Cout), jnp.float32),
        "b3": 0.1 * jax.random.normal(k_b3, (Cout,), jnp.float32),
    }

    x = jax.random.normal(k_x, (B, Cin, H, W), jnp.float32)   # NCHW, like PyTorch

    # One-time preparation (hoisted out of the per-call jitted forward).
    n_imgs = default_images_per_step(B)          # fold batch on v5e/v6e, split on v7x
    packed_w = pack_params(params)
    masks = build_edge_masks(H, W, n_imgs)

    out = rl_segmentation_forward(x, packed_w, masks, cmid=Cmid, cout=Cout,
                                  images_per_step=n_imgs)
    out = jax.block_until_ready(out)

    # Sanity checks against an exact-f32 pure-JAX reference.  Tolerance leaves
    # headroom for possible reduced-precision (bf16-pass) MXU accumulation inside
    # the kernel matmuls; an algorithmic error would be orders of magnitude larger.
    ref = jax.block_until_ready(reference_forward(x, params))
    np.testing.assert_allclose(np.asarray(out), np.asarray(ref), rtol=1e-2, atol=5e-3)
    assert out.shape == (B, Cout, H, W)
    np.testing.assert_allclose(np.asarray(out).sum(axis=1), 1.0, rtol=1e-5, atol=1e-5)

    print("KERNEL_OK")
</pallas_src>

<mosaic_0001>
module attributes {stable_mosaic.version = 11 : i64} {
  func.func @fused_segmentation_kernel(%arg0: i32, %arg1: memref<9x512xf32, #tpu.memory_space<vmem>>, %arg2: memref<1x512xf32, #tpu.memory_space<vmem>>, %arg3: memref<24x128xf32, #tpu.memory_space<vmem>>, %arg4: memref<2x2x256xf32, #tpu.memory_space<vmem>>, %arg5: memref<72x512xf32, #tpu.memory_space<vmem>>) attributes {dimension_semantics = [#tpu.dimension_semantics<parallel>], iteration_bounds = array<i64: 1>, scalar_prefetch = 0 : i64, scratch_operands = 1 : i64, tpu.core_type = #tpu.core_type<tc>, window_params = [{pipeline_mode = #tpu.pipeline_mode<synchronous>, transform_indices = @transform_0, window_bounds = array<i64: 9, 512>}, {transform_indices = @transform_1, window_bounds = array<i64: 1, 512>}, {pipeline_mode = #tpu.pipeline_mode<synchronous>, transform_indices = @transform_2, window_bounds = array<i64: 24, 128>}, {transform_indices = @transform_3, window_bounds = array<i64: 2, 2, 256>}]} {
    %c0 = arith.constant 0 : index
    %c0_0 = arith.constant 0 : index
    %0 = vector.load %arg2[%c0, %c0_0] : memref<1x512xf32, #tpu.memory_space<vmem>>, vector<1x512xf32>
    %c0_1 = arith.constant 0 : index
    %c0_2 = arith.constant 0 : index
    %1 = vector.load %arg3[%c0_1, %c0_2] : memref<24x128xf32, #tpu.memory_space<vmem>>, vector<8x9xf32>
    %c0_3 = arith.constant 0 : index
    %c9 = arith.constant 9 : index
    %2 = vector.load %arg3[%c0_3, %c9] : memref<24x128xf32, #tpu.memory_space<vmem>>, vector<8x1xf32>
    %cst = arith.constant 0.000000e+00 : f32
    %3 = vector.broadcast %cst : f32 to vector<8x512xf32>
    %c17_i32 = arith.constant 17 : i32
    %4 = tpu.dynamic_rotate %0 by %c17_i32 dim 1 : vector<1x512xf32>, i32 -> vector<1x512xf32>
    %c0_4 = arith.constant 0 : index
    %c0_5 = arith.constant 0 : index
    %5 = vector.load %arg1[%c0_4, %c0_5] : memref<9x512xf32, #tpu.memory_space<vmem>>, vector<1x512xf32>
    %6 = arith.mulf %4, %5 : vector<1x512xf32>
    %7 = vector.extract_strided_slice %1 {offsets = [0, 0], sizes = [8, 1], strides = [1, 1]} : vector<8x9xf32> to vector<8x1xf32>
    %8 = vector.broadcast %7 : vector<8x1xf32> to vector<8x512xf32>
    %9 = vector.broadcast %6 : vector<1x512xf32> to vector<8x512xf32>
    %10 = arith.mulf %8, %9 : vector<8x512xf32>
    %11 = arith.addf %3, %10 : vector<8x512xf32>
    %c16_i32 = arith.constant 16 : i32
    %12 = tpu.dynamic_rotate %0 by %c16_i32 dim 1 : vector<1x512xf32>, i32 -> vector<1x512xf32>
    %c1 = arith.constant 1 : index
    %c0_6 = arith.constant 0 : index
    %13 = vector.load %arg1[%c1, %c0_6] : memref<9x512xf32, #tpu.memory_space<vmem>>, vector<1x512xf32>
    %14 = arith.mulf %12, %13 : vector<1x512xf32>
    %15 = vector.extract_strided_slice %1 {offsets = [0, 1], sizes = [8, 1], strides = [1, 1]} : vector<8x9xf32> to vector<8x1xf32>
    %16 = vector.broadcast %15 : vector<8x1xf32> to vector<8x512xf32>
    %17 = vector.broadcast %14 : vector<1x512xf32> to vector<8x512xf32>
    %18 = arith.mulf %16, %17 : vector<8x512xf32>
    %19 = arith.addf %11, %18 : vector<8x512xf32>
    %c15_i32 = arith.constant 15 : i32
    %20 = tpu.dynamic_rotate %0 by %c15_i32 dim 1 : vector<1x512xf32>, i32 -> vector<1x512xf32>
    %c2 = arith.constant 2 : index
    %c0_7 = arith.constant 0 : index
    %21 = vector.load %arg1[%c2, %c0_7] : memref<9x512xf32, #tpu.memory_space<vmem>>, vector<1x512xf32>
    %22 = arith.mulf %20, %21 : vector<1x512xf32>
    %23 = vector.extract_strided_slice %1 {offsets = [0, 2], sizes = [8, 1], strides = [1, 1]} : vector<8x9xf32> to vector<8x1xf32>
    %24 = vector.broadcast %23 : vector<8x1xf32> to vector<8x512xf32>
    %25 = vector.broadcast %22 : vector<1x512xf32> to vector<8x512xf32>
    %26 = arith.mulf %24, %25 : vector<8x512xf32>
    %27 = arith.addf %19, %26 : vector<8x512xf32>
    %c1_i32 = arith.constant 1 : i32
    %28 = tpu.dynamic_rotate %0 by %c1_i32 dim 1 : vector<1x512xf32>, i32 -> vector<1x512xf32>
    %c3 = arith.constant 3 : index
    %c0_8 = arith.constant 0 : index
    %29 = vector.load %arg1[%c3, %c0_8] : memref<9x512xf32, #tpu.memory_space<vmem>>, vector<1x512xf32>
    %30 = arith.mulf %28, %29 : vector<1x512xf32>
    %31 = vector.extract_strided_slice %1 {offsets = [0, 3], sizes = [8, 1], strides = [1, 1]} : vector<8x9xf32> to vector<8x1xf32>
    %32 = vector.broadcast %31 : vector<8x1xf32> to vector<8x512xf32>
    %33 = vector.broadcast %30 : vector<1x512xf32> to vector<8x512xf32>
    %34 = arith.mulf %32, %33 : vector<8x512xf32>
    %35 = arith.addf %27, %34 : vector<8x512xf32>
    %c4 = arith.constant 4 : index
    %c0_9 = arith.constant 0 : index
    %36 = vector.load %arg1[%c4, %c0_9] : memref<9x512xf32, #tpu.memory_space<vmem>>, vector<1x512xf32>
    %37 = arith.mulf %0, %36 : vector<1x512xf32>
    %38 = vector.extract_strided_slice %1 {offsets = [0, 4], sizes = [8, 1], strides = [1, 1]} : vector<8x9xf32> to vector<8x1xf32>
    %39 = vector.broadcast %38 : vector<8x1xf32> to vector<8x512xf32>
    %40 = vector.broadcast %37 : vector<1x512xf32> to vector<8x512xf32>
    %41 = arith.mulf %39, %40 : vector<8x512xf32>
    %42 = arith.addf %35, %41 : vector<8x512xf32>
    %c511_i32 = arith.constant 511 : i32
    %43 = tpu.dynamic_rotate %0 by %c511_i32 dim 1 : vector<1x512xf32>, i32 -> vector<1x512xf32>
    %c5 = arith.constant 5 : index
    %c0_10 = arith.constant 0 : index
    %44 = vector.load %arg1[%c5, %c0_10] : memref<9x512xf32, #tpu.memory_space<vmem>>, vector<1x512xf32>
    %45 = arith.mulf %43, %44 : vector<1x512xf32>
    %46 = vector.extract_strided_slice %1 {offsets = [0, 5], sizes = [8, 1], strides = [1, 1]} : vector<8x9xf32> to vector<8x1xf32>
    %47 = vector.broadcast %46 : vector<8x1xf32> to vector<8x512xf32>
    %48 = vector.broadcast %45 : vector<1x512xf32> to vector<8x512xf32>
    %49 = arith.mulf %47, %48 : vector<8x512xf32>
    %50 = arith.addf %42, %49 : vector<8x512xf32>
    %c497_i32 = arith.constant 497 : i32
    %51 = tpu.dynamic_rotate %0 by %c497_i32 dim 1 : vector<1x512xf32>, i32 -> vector<1x512xf32>
    %c6 = arith.constant 6 : index
    %c0_11 = arith.constant 0 : index
    %52 = vector.load %arg1[%c6, %c0_11] : memref<9x512xf32, #tpu.memory_space<vmem>>, vector<1x512xf32>
    %53 = arith.mulf %51, %52 : vector<1x512xf32>
    %54 = vector.extract_strided_slice %1 {offsets = [0, 6], sizes = [8, 1], strides = [1, 1]} : vector<8x9xf32> to vector<8x1xf32>
    %55 = vector.broadcast %54 : vector<8x1xf32> to vector<8x512xf32>
    %56 = vector.broadcast %53 : vector<1x512xf32> to vector<8x512xf32>
    %57 = arith.mulf %55, %56 : vector<8x512xf32>
    %58 = arith.addf %50, %57 : vector<8x512xf32>
    %c496_i32 = arith.constant 496 : i32
    %59 = tpu.dynamic_rotate %0 by %c496_i32 dim 1 : vector<1x512xf32>, i32 -> vector<1x512xf32>
    %c7 = arith.constant 7 : index
    %c0_12 = arith.constant 0 : index
    %60 = vector.load %arg1[%c7, %c0_12] : memref<9x512xf32, #tpu.memory_space<vmem>>, vector<1x512xf32>
    %61 = arith.mulf %59, %60 : vector<1x512xf32>
    %62 = vector.extract_strided_slice %1 {offsets = [0, 7], sizes = [8, 1], strides = [1, 1]} : vector<8x9xf32> to vector<8x1xf32>
    %63 = vector.broadcast %62 : vector<8x1xf32> to vector<8x512xf32>
    %64 = vector.broadcast %61 : vector<1x512xf32> to vector<8x512xf32>
    %65 = arith.mulf %63, %64 : vector<8x512xf32>
    %66 = arith.addf %58, %65 : vector<8x512xf32>
    %c495_i32 = arith.constant 495 : i32
    %67 = tpu.dynamic_rotate %0 by %c495_i32 dim 1 : vector<1x512xf32>, i32 -> vector<1x512xf32>
    %c8 = arith.constant 8 : index
    %c0_13 = arith.constant 0 : index
    %68 = vector.load %arg1[%c8, %c0_13] : memref<9x512xf32, #tpu.memory_space<vmem>>, vector<1x512xf32>
    %69 = arith.mulf %67, %68 : vector<1x512xf32>
    %70 = vector.extract_strided_slice %1 {offsets = [0, 8], sizes = [8, 1], strides = [1, 1]} : vector<8x9xf32> to vector<8x1xf32>
    %71 = vector.broadcast %70 : vector<8x1xf32> to vector<8x512xf32>
    %72 = vector.broadcast %69 : vector<1x512xf32> to vector<8x512xf32>
    %73 = arith.mulf %71, %72 : vector<8x512xf32>
    %74 = arith.addf %66, %73 : vector<8x512xf32>
    %75 = vector.broadcast %2 : vector<8x1xf32> to vector<8x512xf32>
    %76 = arith.addf %74, %75 : vector<8x512xf32>
    %cst_14 = arith.constant 0.000000e+00 : f32
    %77 = vector.broadcast %cst_14 : f32 to vector<8x512xf32>
    %78 = arith.maximumf %76, %77 : vector<8x512xf32>
    %c8_15 = arith.constant 8 : index
    %c0_16 = arith.constant 0 : index
    %79 = vector.load %arg3[%c8_15, %c0_16] : memref<24x128xf32, #tpu.memory_space<vmem>>, vector<8x72xf32>
    %c8_17 = arith.constant 8 : index
    %c72 = arith.constant 72 : index
    %80 = vector.load %arg3[%c8_17, %c72] : memref<24x128xf32, #tpu.memory_space<vmem>>, vector<8x1xf32>
    %c17_i32_18 = arith.constant 17 : i32
    %81 = tpu.dynamic_rotate %78 by %c17_i32_18 dim 1 : vector<8x512xf32>, i32 -> vector<8x512xf32>
    %c0_19 = arith.constant 0 : index
    %c0_20 = arith.constant 0 : index
    %82 = vector.load %arg1[%c0_19, %c0_20] : memref<9x512xf32, #tpu.memory_space<vmem>>, vector<1x512xf32>
    %83 = vector.broadcast %82 : vector<1x512xf32> to vector<8x512xf32>
    %84 = arith.mulf %81, %83 : vector<8x512xf32>
    %c0_21 = arith.constant 0 : index
    %c0_22 = arith.constant 0 : index
    %85 = vector.load %arg5[%c0_21, %c0_22] : memref<72x512xf32, #tpu.memory_space<vmem>>, vector<8x512xf32>
    tpu.vector_store %arg5[%c0_21, %c0_22], %84 {strides = array<i32>} : memref<72x512xf32, #tpu.memory_space<vmem>>, vector<8x512xf32>,
    %c16_i32_23 = arith.constant 16 : i32
    %86 = tpu.dynamic_rotate %78 by %c16_i32_23 dim 1 : vector<8x512xf32>, i32 -> vector<8x512xf32>
    %c1_24 = arith.constant 1 : index
    %c0_25 = arith.constant 0 : index
    %87 = vector.load %arg1[%c1_24, %c0_25] : memref<9x512xf32, #tpu.memory_space<vmem>>, vector<1x512xf32>
    %88 = vector.broadcast %87 : vector<1x512xf32> to vector<8x512xf32>
    %89 = arith.mulf %86, %88 : vector<8x512xf32>
    %c8_26 = arith.constant 8 : index
    %c0_27 = arith.constant 0 : index
    %90 = vector.load %arg5[%c8_26, %c0_27] : memref<72x512xf32, #tpu.memory_space<vmem>>, vector<8x512xf32>
    tpu.vector_store %arg5[%c8_26, %c0_27], %89 {strides = array<i32>} : memref<72x512xf32, #tpu.memory_space<vmem>>, vector<8x512xf32>,
    %c15_i32_28 = arith.constant 15 : i32
    %91 = tpu.dynamic_rotate %78 by %c15_i32_28 dim 1 : vector<8x512xf32>, i32 -> vector<8x512xf32>
    %c2_29 = arith.constant 2 : index
    %c0_30 = arith.constant 0 : index
    %92 = vector.load %arg1[%c2_29, %c0_30] : memref<9x512xf32, #tpu.memory_space<vmem>>, vector<1x512xf32>
    %93 = vector.broadcast %92 : vector<1x512xf32> to vector<8x512xf32>
    %94 = arith.mulf %91, %93 : vector<8x512xf32>
    %c16 = arith.constant 16 : index
    %c0_31 = arith.constant 0 : index
    %95 = vector.load %arg5[%c16, %c0_31] : memref<72x512xf32, #tpu.memory_space<vmem>>, vector<8x512xf32>
    tpu.vector_store %arg5[%c16, %c0_31], %94 {strides = array<i32>} : memref<72x512xf32, #tpu.memory_space<vmem>>, vector<8x512xf32>,
    %c1_i32_32 = arith.constant 1 : i32
    %96 = tpu.dynamic_rotate %78 by %c1_i32_32 dim 1 : vector<8x512xf32>, i32 -> vector<8x512xf32>
    %c3_33 = arith.constant 3 : index
    %c0_34 = arith.constant 0 : index
    %97 = vector.load %arg1[%c3_33, %c0_34] : memref<9x512xf32, #tpu.memory_space<vmem>>, vector<1x512xf32>
    %98 = vector.broadcast %97 : vector<1x512xf32> to vector<8x512xf32>
    %99 = arith.mulf %96, %98 : vector<8x512xf32>
    %c24 = arith.constant 24 : index
    %c0_35 = arith.constant 0 : index
    %100 = vector.load %arg5[%c24, %c0_35] : memref<72x512xf32, #tpu.memory_space<vmem>>, vector<8x512xf32>
    tpu.vector_store %arg5[%c24, %c0_35], %99 {strides = array<i32>} : memref<72x512xf32, #tpu.memory_space<vmem>>, vector<8x512xf32>,
    %c4_36 = arith.constant 4 : index
    %c0_37 = arith.constant 0 : index
    %101 = vector.load %arg1[%c4_36, %c0_37] : memref<9x512xf32, #tpu.memory_space<vmem>>, vector<1x512xf32>
    %102 = vector.broadcast %101 : vector<1x512xf32> to vector<8x512xf32>
    %103 = arith.mulf %78, %102 : vector<8x512xf32>
    %c32 = arith.constant 32 : index
    %c0_38 = arith.constant 0 : index
    %104 = vector.load %arg5[%c32, %c0_38] : memref<72x512xf32, #tpu.memory_space<vmem>>, vector<8x512xf32>
    tpu.vector_store %arg5[%c32, %c0_38], %103 {strides = array<i32>} : memref<72x512xf32, #tpu.memory_space<vmem>>, vector<8x512xf32>,
    %c511_i32_39 = arith.constant 511 : i32
    %105 = tpu.dynamic_rotate %78 by %c511_i32_39 dim 1 : vector<8x512xf32>, i32 -> vector<8x512xf32>
    %c5_40 = arith.constant 5 : index
    %c0_41 = arith.constant 0 : index
    %106 = vector.load %arg1[%c5_40, %c0_41] : memref<9x512xf32, #tpu.memory_space<vmem>>, vector<1x512xf32>
    %107 = vector.broadcast %106 : vector<1x512xf32> to vector<8x512xf32>
    %108 = arith.mulf %105, %107 : vector<8x512xf32>
    %c40 = arith.constant 40 : index
    %c0_42 = arith.constant 0 : index
    %109 = vector.load %arg5[%c40, %c0_42] : memref<72x512xf32, #tpu.memory_space<vmem>>, vector<8x512xf32>
    tpu.vector_store %arg5[%c40, %c0_42], %108 {strides = array<i32>} : memref<72x512xf32, #tpu.memory_space<vmem>>, vector<8x512xf32>,
    %c497_i32_43 = arith.constant 497 : i32
    %110 = tpu.dynamic_rotate %78 by %c497_i32_43 dim 1 : vector<8x512xf32>, i32 -> vector<8x512xf32>
    %c6_44 = arith.constant 6 : index
    %c0_45 = arith.constant 0 : index
    %111 = vector.load %arg1[%c6_44, %c0_45] : memref<9x512xf32, #tpu.memory_space<vmem>>, vector<1x512xf32>
    %112 = vector.broadcast %111 : vector<1x512xf32> to vector<8x512xf32>
    %113 = arith.mulf %110, %112 : vector<8x512xf32>
    %c48 = arith.constant 48 : index
    %c0_46 = arith.constant 0 : index
    %114 = vector.load %arg5[%c48, %c0_46] : memref<72x512xf32, #tpu.memory_space<vmem>>, vector<8x512xf32>
    tpu.vector_store %arg5[%c48, %c0_46], %113 {strides = array<i32>} : memref<72x512xf32, #tpu.memory_space<vmem>>, vector<8x512xf32>,
    %c496_i32_47 = arith.constant 496 : i32
    %115 = tpu.dynamic_rotate %78 by %c496_i32_47 dim 1 : vector<8x512xf32>, i32 -> vector<8x512xf32>
    %c7_48 = arith.constant 7 : index
    %c0_49 = arith.constant 0 : index
    %116 = vector.load %arg1[%c7_48, %c0_49] : memref<9x512xf32, #tpu.memory_space<vmem>>, vector<1x512xf32>
    %117 = vector.broadcast %116 : vector<1x512xf32> to vector<8x512xf32>
    %118 = arith.mulf %115, %117 : vector<8x512xf32>
    %c56 = arith.constant 56 : index
    %c0_50 = arith.constant 0 : index
    %119 = vector.load %arg5[%c56, %c0_50] : memref<72x512xf32, #tpu.memory_space<vmem>>, vector<8x512xf32>
    tpu.vector_store %arg5[%c56, %c0_50], %118 {strides = array<i32>} : memref<72x512xf32, #tpu.memory_space<vmem>>, vector<8x512xf32>,
    %c495_i32_51 = arith.constant 495 : i32
    %120 = tpu.dynamic_rotate %78 by %c495_i32_51 dim 1 : vector<8x512xf32>, i32 -> vector<8x512xf32>
    %c8_52 = arith.constant 8 : index
    %c0_53 = arith.constant 0 : index
    %121 = vector.load %arg1[%c8_52, %c0_53] : memref<9x512xf32, #tpu.memory_space<vmem>>, vector<1x512xf32>
    %122 = vector.broadcast %121 : vector<1x512xf32> to vector<8x512xf32>
    %123 = arith.mulf %120, %122 : vector<8x512xf32>
    %c64 = arith.constant 64 : index
    %c0_54 = arith.constant 0 : index
    %124 = vector.load %arg5[%c64, %c0_54] : memref<72x512xf32, #tpu.memory_space<vmem>>, vector<8x512xf32>
    tpu.vector_store %arg5[%c64, %c0_54], %123 {strides = array<i32>} : memref<72x512xf32, #tpu.memory_space<vmem>>, vector<8x512xf32>,
    %c0_55 = arith.constant 0 : index
    %c0_56 = arith.constant 0 : index
    %125 = vector.load %arg5[%c0_55, %c0_56] : memref<72x512xf32, #tpu.memory_space<vmem>>, vector<72x512xf32>
    %cst_57 = arith.constant dense<0.000000e+00> : vector<8x512xf32>
    %126 = tpu.matmul %79, %125, %cst_57 {dimension_numbers = #tpu.dot_dimension_numbers<[1], [0], [0], [1], [0, 0, 1, 1], [], []>} : vector<8x72xf32>, vector<72x512xf32>, vector<8x512xf32> -> vector<8x512xf32>
    %127 = vector.broadcast %80 : vector<8x1xf32> to vector<8x512xf32>
    %128 = arith.addf %126, %127 : vector<8x512xf32>
    %cst_58 = arith.constant 0.000000e+00 : f32
    %129 = vector.broadcast %cst_58 : f32 to vector<8x512xf32>
    %130 = arith.maximumf %128, %129 : vector<8x512xf32>
    %c16_59 = arith.constant 16 : index
    %c0_60 = arith.constant 0 : index
    %131 = vector.load %arg3[%c16_59, %c0_60] : memref<24x128xf32, #tpu.memory_space<vmem>>, vector<2x8xf32>
    %c16_61 = arith.constant 16 : index
    %c8_62 = arith.constant 8 : index
    %132 = vector.load %arg3[%c16_61, %c8_62] : memref<24x128xf32, #tpu.memory_space<vmem>>, vector<2x1xf32>
    %cst_63 = arith.constant dense<0.000000e+00> : vector<2x512xf32>
    %133 = tpu.matmul %131, %130, %cst_63 {dimension_numbers = #tpu.dot_dimension_numbers<[1], [0], [0], [1], [0, 0, 1, 1], [], []>} : vector<2x8xf32>, vector<8x512xf32>, vector<2x512xf32> -> vector<2x512xf32>
    %134 = vector.broadcast %132 : vector<2x1xf32> to vector<2x512xf32>
    %135 = arith.addf %133, %134 : vector<2x512xf32>
    %136 = vector.extract_strided_slice %135 {offsets = [1, 0], sizes = [1, 512], strides = [1, 1]} : vector<2x512xf32> to vector<1x512xf32>
    %137 = vector.extract_strided_slice %135 {offsets = [0, 0], sizes = [1, 512], strides = [1, 1]} : vector<2x512xf32> to vector<1x512xf32>
    %138 = arith.subf %136, %137 : vector<1x512xf32>
    %cst_64 = arith.constant 0.000000e+00 : f32
    %139 = vector.broadcast %cst_64 : f32 to vector<1x512xf32>
    %140 = arith.subf %139, %138 : vector<1x512xf32>
    %141 = math.exp %140 : vector<1x512xf32>
    %cst_65 = arith.constant 1.000000e+00 : f32
    %142 = vector.broadcast %cst_65 : f32 to vector<1x512xf32>
    %143 = arith.addf %142, %141 : vector<1x512xf32>
    %cst_66 = arith.constant 1.000000e+00 : f32
    %144 = vector.broadcast %cst_66 : f32 to vector<1x512xf32>
    %145 = arith.divf %144, %143 : vector<1x512xf32>
    %cst_67 = arith.constant 1.000000e+00 : f32
    %146 = vector.broadcast %cst_67 : f32 to vector<1x512xf32>
    %147 = arith.subf %146, %145 : vector<1x512xf32>
    %148 = vector.extract_strided_slice %147 {offsets = [0, 0], sizes = [1, 256], strides = [1, 1]} : vector<1x512xf32> to vector<1x256xf32>
    %149 = vector.shape_cast %148 : vector<1x256xf32> to vector<1x1x256xf32>
    %c0_68 = arith.constant 0 : index
    %c0_69 = arith.constant 0 : index
    %c0_70 = arith.constant 0 : index
    %150 = vector.load %arg4[%c0_68, %c0_69, %c0_70] : memref<2x2x256xf32, #tpu.memory_space<vmem>>, vector<1x1x256xf32>
    tpu.vector_store %arg4[%c0_68, %c0_69, %c0_70], %149 {strides = array<i32>} : memref<2x2x256xf32, #tpu.memory_space<vmem>>, vector<1x1x256xf32>,
    %151 = vector.extract_strided_slice %145 {offsets = [0, 0], sizes = [1, 256], strides = [1, 1]} : vector<1x512xf32> to vector<1x256xf32>
    %152 = vector.shape_cast %151 : vector<1x256xf32> to vector<1x1x256xf32>
    %c0_71 = arith.constant 0 : index
    %c1_72 = arith.constant 1 : index
    %c0_73 = arith.constant 0 : index
    %153 = vector.load %arg4[%c0_71, %c1_72, %c0_73] : memref<2x2x256xf32, #tpu.memory_space<vmem>>, vector<1x1x256xf32>
    tpu.vector_store %arg4[%c0_71, %c1_72, %c0_73], %152 {strides = array<i32>} : memref<2x2x256xf32, #tpu.memory_space<vmem>>, vector<1x1x256xf32>,
    %154 = vector.extract_strided_slice %147 {offsets = [0, 256], sizes = [1, 256], strides = [1, 1]} : vector<1x512xf32> to vector<1x256xf32>
    %155 = vector.shape_cast %154 : vector<1x256xf32> to vector<1x1x256xf32>
    %c1_74 = arith.constant 1 : index
    %c0_75 = arith.constant 0 : index
    %c0_76 = arith.constant 0 : index
    %156 = vector.load %arg4[%c1_74, %c0_75, %c0_76] : memref<2x2x256xf32, #tpu.memory_space<vmem>>, vector<1x1x256xf32>
    tpu.vector_store %arg4[%c1_74, %c0_75, %c0_76], %155 {strides = array<i32>} : memref<2x2x256xf32, #tpu.memory_space<vmem>>, vector<1x1x256xf32>,
    %157 = vector.extract_strided_slice %145 {offsets = [0, 256], sizes = [1, 256], strides = [1, 1]} : vector<1x512xf32> to vector<1x256xf32>
    %158 = vector.shape_cast %157 : vector<1x256xf32> to vector<1x1x256xf32>
    %c1_77 = arith.constant 1 : index
    %c1_78 = arith.constant 1 : index
    %c0_79 = arith.constant 0 : index
    %159 = vector.load %arg4[%c1_77, %c1_78, %c0_79] : memref<2x2x256xf32, #tpu.memory_space<vmem>>, vector<1x1x256xf32>
    tpu.vector_store %arg4[%c1_77, %c1_78, %c0_79], %158 {strides = array<i32>} : memref<2x2x256xf32, #tpu.memory_space<vmem>>, vector<1x1x256xf32>,
    return
  }
  func.func @transform_0(%arg0: i32) -> (i32, i32) {
    %c0_i32 = arith.constant 0 : i32
    %c0_i32_0 = arith.constant 0 : i32
    %c0_i32_1 = arith.constant 0 : i32
    return %c0_i32, %c0_i32_0 : i32, i32
  }
  func.func @transform_1(%arg0: i32) -> (i32, i32) {
    %c0_i32 = arith.constant 0 : i32
    %c0_i32_0 = arith.constant 0 : i32
    return %c0_i32, %arg0 : i32, i32
  }
  func.func @transform_2(%arg0: i32) -> (i32, i32) {
    %c0_i32 = arith.constant 0 : i32
    %c0_i32_0 = arith.constant 0 : i32
    %c0_i32_1 = arith.constant 0 : i32
    return %c0_i32, %c0_i32_0 : i32, i32
  }
  func.func @transform_3(%arg0: i32) -> (i32, i32, i32) {
    %c0_i32 = arith.constant 0 : i32
    %c0_i32_0 = arith.constant 0 : i32
    %c0_i32_1 = arith.constant 0 : i32
    return %arg0, %c0_i32, %c0_i32_0 : i32, i32, i32
  }
}

</mosaic_0001>

<llo_original>
// kernel: rl_segmentation_forward.1
$region0: #{rl_segmentation_forward.1}
  #allocation0 [shape = 'u32[]', space=smem, size = 0x4, offset = 0x4, fixed_abs, tag = 'smem constant byte address 0x4 - core index']
  #allocation1 [shape = 'u32[72,128]{1,0:T(1,128)}', space=vmem, size = 0x9000, scoped, tag = 'internal scratch']
  #allocation2 [shape = 'f32[72,512]{1,0:T(8,128)}', space=vmem, size = 0x24000, scoped, tag = 'scratch operand']
  %s0 = inlined_call_operand.hbm [shape: f32[9,512], index: 0, kind: input, shape index: {}]
  %s1 = inlined_call_operand.vmem [shape: f32[1,512], index: 1, kind: input, shape index: {}]
  %s2 = inlined_call_operand.vmem [shape: f32[24,128], index: 2, kind: input, shape index: {}]
  %s3 = inlined_call_operand.vmem [shape: f32[2,2,256], index: 3, kind: output, shape index: {}]
  %s4 = sld [smem:[#allocation0]]
  $region26: #{rl_segmentation_forward.1} parent=0
    _
  %s6 = ssub.s32 1, %s4
  %s7 = scalar_select 0, %s6, %s4
  $region1: #{rl_segmentation_forward.1} parent=0
    #allocation3 [shape = 'u8[32768]{0}', space=vmem, size = 0x8000, scoped, tag = 'input window, operand 0, single buffered']
    #allocation4 [shape = 's32[1]{0}', space=sflag, size = 0x4, scoped, tag = 'scoped memory for rl_segmentation_forward.1']
    %8 = vsyncpa [#allocation4], 0
    // Predicated region
    $region2: #{rl_segmentation_forward.1} parent=1 // pred_check
      _
    $region3: #{rl_segmentation_forward.1} parent=1 // pred_check_branch
      %10 = sbr.rel (0) target = $region5
    $region4: #{rl_segmentation_forward.1} parent=1 // pred_region
      %12 = vsyncadd [#allocation4], 0
      %s13 = sshll.u32 %s0, 4
      %s14 = int_to_ptr.hbm [resolvable:$true] %s13
      %s15 = sshll.u32 [#allocation3], 4
      %s16 = int_to_ptr.vmem [resolvable:$true] %s15
      %21 = dma.hbm_to_vmem [thread:$0]  %s14, 1024, %s16, [#allocation4], 512, 512, 32
    $region5: #{rl_segmentation_forward.1} parent=1 // pred_fallthru
      _
    // Predicated region
    $region6: #{rl_segmentation_forward.1} parent=1 // pred_check
      _
    $region7: #{rl_segmentation_forward.1} parent=1 // pred_check_branch
      %23 = sbr.rel (0) target = $region9
    $region8: #{rl_segmentation_forward.1} parent=1 // pred_region
      _
    $region9: #{rl_segmentation_forward.1} parent=1 // pred_fallthru
      _
    // Predicated region
    $region10: #{rl_segmentation_forward.1} parent=1 // pred_check
      _
    $region11: #{rl_segmentation_forward.1} parent=1 // pred_check_branch
      %25 = sbr.rel (0) target = $region13
    $region12: #{rl_segmentation_forward.1} parent=1 // pred_region
      _
    $region13: #{rl_segmentation_forward.1} parent=1 // pred_fallthru
      _
    // Predicated region
    $region14: #{rl_segmentation_forward.1} parent=1 // pred_check
      _
    $region15: #{rl_segmentation_forward.1} parent=1 // pred_check_branch
      %27 = sbr.rel (0) target = $region17
    $region16: #{rl_segmentation_forward.1} parent=1 // pred_region
      %29 = dma.done [#allocation4], 1024
    $region17: #{rl_segmentation_forward.1} parent=1 // pred_fallthru
      _
    %v30 = vld [vmem:[%s1] sm:$0xf]
    %v31 = vld [vmem:[%s2] sm:$0xff]
    %v33 = vperm.slane %v30, 0
    %v34 = vperm.slane %v30, 1
    %v35 = vperm.slane %v30, 2
    %v36 = vperm.slane %v30, 3
    %41 = vrot.lane.b32.xlu0 %v33, 17
    %v42 = vpop.permute.xlu0 %41
    %43 = vrot.lane.b32.xlu0 %v34, 17
    %v44 = vpop.permute.xlu0 %43
    %45 = vrot.lane.b32.xlu0 %v35, 17
    %v46 = vpop.permute.xlu0 %45
    %47 = vrot.lane.b32.xlu0 %v36, 17
    %v48 = vpop.permute.xlu0 %47
    %v49 = vlaneseq
    %v50 = vand.u32 %v49, 127
    %vm51 = vcmp.lt.s32.totalorder %v50, 17
    %v52 = vsel %vm51, %v46, %v48
    %v53 = vsel %vm51, %v44, %v46
    %v54 = vsel %vm51, %v42, %v44
    %v55 = vsel %vm51, %v48, %v42
    %v56 = vld [vmem:[#allocation3] ss:$8 sm:$0xf]
    %v58 = vperm.slane %v56, 0
    %v59 = vperm.slane %v56, 1
    %v60 = vperm.slane %v56, 2
    %v61 = vperm.slane %v56, 3
    %v66 = vmul.f32 %v55, %v58
    %v67 = vmul.f32 %v54, %v59
    %v68 = vmul.f32 %v53, %v60
    %v69 = vmul.f32 %v52, %v61
    %71 = vset.pattern.permute.xlu0 0
    %72 = vperm.xlu0 %71, %v31
    %v73 = vpop.permute.xlu0 %72
    %v75 = vperm.slane %v66, 0
    %v76 = vperm.slane %v67, 0
    %v77 = vperm.slane %v68, 0
    %v78 = vperm.slane %v69, 0
    %v79 = vmul.f32 %v73, %v75
    %v80 = vmul.f32 %v73, %v76
    %v81 = vmul.f32 %v73, %v77
    %v82 = vmul.f32 %v73, %v78
    %v83 = vadd.f32 %v79, 0.0
    %v84 = vadd.f32 %v80, 0.0
    %v85 = vadd.f32 %v81, 0.0
    %v86 = vadd.f32 %v82, 0.0
    %87 = vrot.lane.b32.xlu0 %v33, 16
    %v88 = vpop.permute.xlu0 %87
    %89 = vrot.lane.b32.xlu0 %v34, 16
    %v90 = vpop.permute.xlu0 %89
    %91 = vrot.lane.b32.xlu0 %v35, 16
    %v92 = vpop.permute.xlu0 %91
    %93 = vrot.lane.b32.xlu0 %v36, 16
    %v94 = vpop.permute.xlu0 %93
    %vm95 = vcmp.lt.s32.totalorder %v50, 16
    %v96 = vsel %vm95, %v92, %v94
    %v97 = vsel %vm95, %v90, %v92
    %v98 = vsel %vm95, %v88, %v90
    %v99 = vsel %vm95, %v94, %v88
    %s100 = scalar_lea.vmem [#allocation3], 1
    %v101 = vld [vmem:[%s100] ss:$8 sm:$0xf]
    %v103 = vperm.slane %v101, 0
    %v104 = vperm.slane %v101, 1
    %v105 = vperm.slane %v101, 2
    %v106 = vperm.slane %v101, 3
    %v111 = vmul.f32 %v99, %v103
    %v112 = vmul.f32 %v98, %v104
    %v113 = vmul.f32 %v97, %v105
    %v114 = vmul.f32 %v96, %v106
    %115 = vset.pattern.permute.xlu0 1
    %116 = vperm.xlu0 %115, %v31
    %v117 = vpop.permute.xlu0 %116
    %v119 = vperm.slane %v111, 0
    %v120 = vperm.slane %v112, 0
    %v121 = vperm.slane %v113, 0
    %v122 = vperm.slane %v114, 0
    %v123 = vmul.f32 %v117, %v119
    %v124 = vmul.f32 %v117, %v120
    %v125 = vmul.f32 %v117, %v121
    %v126 = vmul.f32 %v117, %v122
    %v127 = vadd.f32 %v83, %v123
    %v128 = vadd.f32 %v84, %v124
    %v129 = vadd.f32 %v85, %v125
    %v130 = vadd.f32 %v86, %v126
    %131 = vrot.lane.b32.xlu0 %v33, 15
    %v132 = vpop.permute.xlu0 %131
    %133 = vrot.lane.b32.xlu0 %v34, 15
    %v134 = vpop.permute.xlu0 %133
    %135 = vrot.lane.b32.xlu0 %v35, 15
    %v136 = vpop.permute.xlu0 %135
    %137 = vrot.lane.b32.xlu0 %v36, 15
    %v138 = vpop.permute.xlu0 %137
    %vm139 = vcmp.lt.s32.totalorder %v50, 15
    %v140 = vsel %vm139, %v136, %v138
    %v141 = vsel %vm139, %v134, %v136
    %v142 = vsel %vm139, %v132, %v134
    %v143 = vsel %vm139, %v138, %v132
    %s144 = scalar_lea.vmem [#allocation3], 2
    %v145 = vld [vmem:[%s144] ss:$8 sm:$0xf]
    %v147 = vperm.slane %v145, 0
    %v148 = vperm.slane %v145, 1
    %v149 = vperm.slane %v145, 2
    %v150 = vperm.slane %v145, 3
    %v155 = vmul.f32 %v143, %v147
    %v156 = vmul.f32 %v142, %v148
    %v157 = vmul.f32 %v141, %v149
    %v158 = vmul.f32 %v140, %v150
    %159 = vset.pattern.permute.xlu0 2
    %160 = vperm.xlu0 %159, %v31
    %v161 = vpop.permute.xlu0 %160
    %v163 = vperm.slane %v155, 0
    %v164 = vperm.slane %v156, 0
    %v165 = vperm.slane %v157, 0
    %v166 = vperm.slane %v158, 0
    %v167 = vmul.f32 %v161, %v163
    %v168 = vmul.f32 %v161, %v164
    %v169 = vmul.f32 %v161, %v165
    %v170 = vmul.f32 %v161, %v166
    %v171 = vadd.f32 %v127, %v167
    %v172 = vadd.f32 %v128, %v168
    %v173 = vadd.f32 %v129, %v169
    %v174 = vadd.f32 %v130, %v170
    %175 = vrot.lane.b32.xlu0 %v33, 1
    %v176 = vpop.permute.xlu0 %175
    %177 = vrot.lane.b32.xlu0 %v34, 1
    %v178 = vpop.permute.xlu0 %177
    %179 = vrot.lane.b32.xlu0 %v35, 1
    %v180 = vpop.permute.xlu0 %179
    %181 = vrot.lane.b32.xlu0 %v36, 1
    %v182 = vpop.permute.xlu0 %181
    %vm183 = vcmp.lt.s32.totalorder %v50, 1
    %v184 = vsel %vm183, %v180, %v182
    %v185 = vsel %vm183, %v178, %v180
    %v186 = vsel %vm183, %v176, %v178
    %v187 = vsel %vm183, %v182, %v176
    %s188 = scalar_lea.vmem [#allocation3], 3
    %v189 = vld [vmem:[%s188] ss:$8 sm:$0xf]
    %v191 = vperm.slane %v189, 0
    %v192 = vperm.slane %v189, 1
    %v193 = vperm.slane %v189, 2
    %v194 = vperm.slane %v189, 3
    %v199 = vmul.f32 %v187, %v191
    %v200 = vmul.f32 %v186, %v192
    %v201 = vmul.f32 %v185, %v193
    %v202 = vmul.f32 %v184, %v194
    %203 = vset.pattern.permute.xlu0 3
    %204 = vperm.xlu0 %203, %v31
    %v205 = vpop.permute.xlu0 %204
    %v207 = vperm.slane %v199, 0
    %v208 = vperm.slane %v200, 0
    %v209 = vperm.slane %v201, 0
    %v210 = vperm.slane %v202, 0
    %v211 = vmul.f32 %v205, %v207
    %v212 = vmul.f32 %v205, %v208
    %v213 = vmul.f32 %v205, %v209
    %v214 = vmul.f32 %v205, %v210
    %v215 = vadd.f32 %v171, %v211
    %v216 = vadd.f32 %v172, %v212
    %v217 = vadd.f32 %v173, %v213
    %v218 = vadd.f32 %v174, %v214
    %s219 = scalar_lea.vmem [#allocation3], 4
    %v220 = vld [vmem:[%s219] ss:$8 sm:$0xf]
    %v221 = vmul.f32 %v30, %v220
    %222 = vset.pattern.permute.xlu0 4
    %223 = vperm.xlu0 %222, %v31
    %v224 = vpop.permute.xlu0 %223
    %v227 = vperm.slane %v221, 0
    %v228 = vperm.slane %v221, 1
    %v229 = vperm.slane %v221, 2
    %v230 = vperm.slane %v221, 3
    %v235 = vmul.f32 %v224, %v227
    %v236 = vmul.f32 %v224, %v228
    %v237 = vmul.f32 %v224, %v229
    %v238 = vmul.f32 %v224, %v230
    %v239 = vadd.f32 %v215, %v235
    %v240 = vadd.f32 %v216, %v236
    %v241 = vadd.f32 %v217, %v237
    %v242 = vadd.f32 %v218, %v238
    %243 = vrot.lane.b32.xlu0 %v33, 127
    %v244 = vpop.permute.xlu0 %243
    %245 = vrot.lane.b32.xlu0 %v34, 127
    %v246 = vpop.permute.xlu0 %245
    %247 = vrot.lane.b32.xlu0 %v35, 127
    %v248 = vpop.permute.xlu0 %247
    %249 = vrot.lane.b32.xlu0 %v36, 127
    %v250 = vpop.permute.xlu0 %249
    %vm251 = vcmp.lt.s32.totalorder %v50, 127
    %v252 = vsel %vm251, %v248, %v250
    %v253 = vsel %vm251, %v246, %v248
    %v254 = vsel %vm251, %v244, %v246
    %v255 = vsel %vm251, %v250, %v244
    %s256 = scalar_lea.vmem [#allocation3], 5
    %v257 = vld [vmem:[%s256] ss:$8 sm:$0xf]
    %v259 = vperm.slane %v257, 0
    %v260 = vperm.slane %v257, 1
    %v261 = vperm.slane %v257, 2
    %v262 = vperm.slane %v257, 3
    %v267 = vmul.f32 %v254, %v259
    %v268 = vmul.f32 %v253, %v260
    %v269 = vmul.f32 %v252, %v261
    %v270 = vmul.f32 %v255, %v262
    %271 = vset.pattern.permute.xlu0 5
    %272 = vperm.xlu0 %271, %v31
    %v273 = vpop.permute.xlu0 %272
    %v275 = vperm.slane %v267, 0
    %v276 = vperm.slane %v268, 0
    %v277 = vperm.slane %v269, 0
    %v278 = vperm.slane %v270, 0
    %v279 = vmul.f32 %v273, %v275
    %v280 = vmul.f32 %v273, %v276
    %v281 = vmul.f32 %v273, %v277
    %v282 = vmul.f32 %v273, %v278
    %v283 = vadd.f32 %v239, %v279
    %v284 = vadd.f32 %v240, %v280
    %v285 = vadd.f32 %v241, %v281
    %v286 = vadd.f32 %v242, %v282
    %287 = vrot.lane.b32.xlu0 %v33, 113
    %v288 = vpop.permute.xlu0 %287
    %289 = vrot.lane.b32.xlu0 %v34, 113
    %v290 = vpop.permute.xlu0 %289
    %291 = vrot.lane.b32.xlu0 %v35, 113
    %v292 = vpop.permute.xlu0 %291
    %293 = vrot.lane.b32.xlu0 %v36, 113
    %v294 = vpop.permute.xlu0 %293
    %vm295 = vcmp.lt.s32.totalorder %v50, 113
    %v296 = vsel %vm295, %v292, %v294
    %v297 = vsel %vm295, %v290, %v292
    %v298 = vsel %vm295, %v288, %v290
    %v299 = vsel %vm295, %v294, %v288
    %s300 = scalar_lea.vmem [#allocation3], 6
    %v301 = vld [vmem:[%s300] ss:$8 sm:$0xf]
    %v303 = vperm.slane %v301, 0
    %v304 = vperm.slane %v301, 1
    %v305 = vperm.slane %v301, 2
    %v306 = vperm.slane %v301, 3
    %v311 = vmul.f32 %v298, %v303
    %v312 = vmul.f32 %v297, %v304
    %v313 = vmul.f32 %v296, %v305
    %v314 = vmul.f32 %v299, %v306
    %315 = vset.pattern.permute.xlu0 6
    %316 = vperm.xlu0 %315, %v31
    %v317 = vpop.permute.xlu0 %316
    %v319 = vperm.slane %v311, 0
    %v320 = vperm.slane %v312, 0
    %v321 = vperm.slane %v313, 0
    %v322 = vperm.slane %v314, 0
    %v323 = vmul.f32 %v317, %v319
    %v324 = vmul.f32 %v317, %v320
    %v325 = vmul.f32 %v317, %v321
    %v326 = vmul.f32 %v317, %v322
    %v327 = vadd.f32 %v283, %v323
    %v328 = vadd.f32 %v284, %v324
    %v329 = vadd.f32 %v285, %v325
    %v330 = vadd.f32 %v286, %v326
    %331 = vrot.lane.b32.xlu0 %v33, 112
    %v332 = vpop.permute.xlu0 %331
    %333 = vrot.lane.b32.xlu0 %v34, 112
    %v334 = vpop.permute.xlu0 %333
    %335 = vrot.lane.b32.xlu0 %v35, 112
    %v336 = vpop.permute.xlu0 %335
    %337 = vrot.lane.b32.xlu0 %v36, 112
    %v338 = vpop.permute.xlu0 %337
    %vm339 = vcmp.lt.s32.totalorder %v50, 112
    %v340 = vsel %vm339, %v336, %v338
    %v341 = vsel %vm339, %v334, %v336
    %v342 = vsel %vm339, %v332, %v334
    %v343 = vsel %vm339, %v338, %v332
    %s344 = scalar_lea.vmem [#allocation3], 7
    %v345 = vld [vmem:[%s344] ss:$8 sm:$0xf]
    %v347 = vperm.slane %v345, 0
    %v348 = vperm.slane %v345, 1
    %v349 = vperm.slane %v345, 2
    %v350 = vperm.slane %v345, 3
    %v355 = vmul.f32 %v342, %v347
    %v356 = vmul.f32 %v341, %v348
    %v357 = vmul.f32 %v340, %v349
    %v358 = vmul.f32 %v343, %v350
    %359 = vset.pattern.permute.xlu0 7
    %360 = vperm.xlu0 %359, %v31
    %v361 = vpop.permute.xlu0 %360
    %v363 = vperm.slane %v355, 0
    %v364 = vperm.slane %v356, 0
    %v365 = vperm.slane %v357, 0
    %v366 = vperm.slane %v358, 0
    %v367 = vmul.f32 %v361, %v363
    %v368 = vmul.f32 %v361, %v364
    %v369 = vmul.f32 %v361, %v365
    %v370 = vmul.f32 %v361, %v366
    %v371 = vadd.f32 %v327, %v367
    %v372 = vadd.f32 %v328, %v368
    %v373 = vadd.f32 %v329, %v369
    %v374 = vadd.f32 %v330, %v370
    %375 = vrot.lane.b32.xlu0 %v33, 111
    %v376 = vpop.permute.xlu0 %375
    %377 = vrot.lane.b32.xlu0 %v34, 111
    %v378 = vpop.permute.xlu0 %377
    %379 = vrot.lane.b32.xlu0 %v35, 111
    %v380 = vpop.permute.xlu0 %379
    %381 = vrot.lane.b32.xlu0 %v36, 111
    %v382 = vpop.permute.xlu0 %381
    %vm383 = vcmp.lt.s32.totalorder %v50, 111
    %v384 = vsel %vm383, %v380, %v382
    %v385 = vsel %vm383, %v378, %v380
    %v386 = vsel %vm383, %v376, %v378
    %v387 = vsel %vm383, %v382, %v376
    %s388 = scalar_lea.vmem [#allocation3], 32
    %v389 = vld [vmem:[%s388] ss:$8 sm:$0xf]
    %v391 = vperm.slane %v389, 0
    %v392 = vperm.slane %v389, 1
    %v393 = vperm.slane %v389, 2
    %v394 = vperm.slane %v389, 3
    %v399 = vmul.f32 %v386, %v391
    %v400 = vmul.f32 %v385, %v392
    %v401 = vmul.f32 %v384, %v393
    %v402 = vmul.f32 %v387, %v394
    %403 = vset.pattern.permute.xlu0 8
    %404 = vperm.xlu0 %403, %v31
    %v405 = vpop.permute.xlu0 %404
    %v407 = vperm.slane %v399, 0
    %v408 = vperm.slane %v400, 0
    %v409 = vperm.slane %v401, 0
    %v410 = vperm.slane %v402, 0
    %v411 = vmul.f32 %v405, %v407
    %v412 = vmul.f32 %v405, %v408
    %v413 = vmul.f32 %v405, %v409
    %v414 = vmul.f32 %v405, %v410
    %v415 = vadd.f32 %v371, %v411
    %v416 = vadd.f32 %v372, %v412
    %v417 = vadd.f32 %v373, %v413
    %v418 = vadd.f32 %v374, %v414
    %419 = vset.pattern.permute.xlu0 9
    %420 = vperm.xlu0 %419, %v31
    %v421 = vpop.permute.xlu0 %420
    %v423 = vadd.f32 %v415, %v421
    %v424 = vadd.f32 %v416, %v421
    %v425 = vadd.f32 %v417, %v421
    %v426 = vadd.f32 %v418, %v421
    %v427 = vmax.f32 %v423, 0.0
    %v428 = vmax.f32 %v424, 0.0
    %v429 = vmax.f32 %v425, 0.0
    %v430 = vmax.f32 %v426, 0.0
    %v431 = vld [vmem:[%s2 + $0x8] sm:$0xff]
    %432 = vrot.lane.b32.xlu0 %v427, 17
    %v433 = vpop.permute.xlu0 %432
    %434 = vrot.lane.b32.xlu0 %v428, 17
    %v435 = vpop.permute.xlu0 %434
    %436 = vrot.lane.b32.xlu0 %v429, 17
    %v437 = vpop.permute.xlu0 %436
    %438 = vrot.lane.b32.xlu0 %v430, 17
    %v439 = vpop.permute.xlu0 %438
    %v440 = vsel %vm51, %v437, %v439
    %v441 = vsel %vm51, %v435, %v437
    %v442 = vsel %vm51, %v433, %v435
    %v443 = vsel %vm51, %v439, %v433
    %v444 = vmul.f32 %v443, %v58
    %v445 = vmul.f32 %v442, %v59
    %v446 = vmul.f32 %v441, %v60
    %v447 = vmul.f32 %v440, %v61
    %448 = vst [vmem:[#allocation2] sm:$0xff] %v444
    %449 = vst [vmem:[#allocation2 + $0x8] sm:$0xff] %v445
    %450 = vst [vmem:[#allocation2 + $0x10] sm:$0xff] %v446
    %451 = vst [vmem:[#allocation2 + $0x18] sm:$0xff] %v447
    %452 = vrot.lane.b32.xlu0 %v427, 16
    %v453 = vpop.permute.xlu0 %452
    %454 = vrot.lane.b32.xlu0 %v428, 16
    %v455 = vpop.permute.xlu0 %454
    %456 = vrot.lane.b32.xlu0 %v429, 16
    %v457 = vpop.permute.xlu0 %456
    %458 = vrot.lane.b32.xlu0 %v430, 16
    %v459 = vpop.permute.xlu0 %458
    %v460 = vsel %vm95, %v457, %v459
    %v461 = vsel %vm95, %v455, %v457
    %v462 = vsel %vm95, %v453, %v455
    %v463 = vsel %vm95, %v459, %v453
    %v464 = vld [vmem:[%s100] ss:$8 sm:$0xf]
    %v466 = vperm.slane %v464, 0
    %v467 = vperm.slane %v464, 1
    %v468 = vperm.slane %v464, 2
    %v469 = vperm.slane %v464, 3
    %v474 = vmul.f32 %v463, %v466
    %v475 = vmul.f32 %v462, %v467
    %v476 = vmul.f32 %v461, %v468
    %v477 = vmul.f32 %v460, %v469
    %478 = vst [vmem:[#allocation2 + $0x20] sm:$0xff] %v474
    %479 = vst [vmem:[#allocation2 + $0x28] sm:$0xff] %v475
    %480 = vst [vmem:[#allocation2 + $0x30] sm:$0xff] %v476
    %481 = vst [vmem:[#allocation2 + $0x38] sm:$0xff] %v477
    %482 = vrot.lane.b32.xlu0 %v427, 15
    %v483 = vpop.permute.xlu0 %482
    %484 = vrot.lane.b32.xlu0 %v428, 15
    %v485 = vpop.permute.xlu0 %484
    %486 = vrot.lane.b32.xlu0 %v429, 15
    %v487 = vpop.permute.xlu0 %486
    %488 = vrot.lane.b32.xlu0 %v430, 15
    %v489 = vpop.permute.xlu0 %488
    %v490 = vsel %vm139, %v487, %v489
    %v491 = vsel %vm139, %v485, %v487
    %v492 = vsel %vm139, %v483, %v485
    %v493 = vsel %vm139, %v489, %v483
    %v494 = vld [vmem:[%s144] ss:$8 sm:$0xf]
    %v496 = vperm.slane %v494, 0
    %v497 = vperm.slane %v494, 1
    %v498 = vperm.slane %v494, 2
    %v499 = vperm.slane %v494, 3
    %v504 = vmul.f32 %v493, %v496
    %v505 = vmul.f32 %v492, %v497
    %v506 = vmul.f32 %v491, %v498
    %v507 = vmul.f32 %v490, %v499
    %508 = vst [vmem:[#allocation2 + $0x40] sm:$0xff] %v504
    %509 = vst [vmem:[#allocation2 + $0x48] sm:$0xff] %v505
    %510 = vst [vmem:[#allocation2 + $0x50] sm:$0xff] %v506
    %511 = vst [vmem:[#allocation2 + $0x58] sm:$0xff] %v507
    %512 = vrot.lane.b32.xlu0 %v427, 1
    %v513 = vpop.permute.xlu0 %512
    %514 = vrot.lane.b32.xlu0 %v428, 1
    %v515 = vpop.permute.xlu0 %514
    %516 = vrot.lane.b32.xlu0 %v429, 1
    %v517 = vpop.permute.xlu0 %516
    %518 = vrot.lane.b32.xlu0 %v430, 1
    %v519 = vpop.permute.xlu0 %518
    %v520 = vsel %vm183, %v517, %v519
    %v521 = vsel %vm183, %v515, %v517
    %v522 = vsel %vm183, %v513, %v515
    %v523 = vsel %vm183, %v519, %v513
    %v524 = vld [vmem:[%s188] ss:$8 sm:$0xf]
    %v526 = vperm.slane %v524, 0
    %v527 = vperm.slane %v524, 1
    %v528 = vperm.slane %v524, 2
    %v529 = vperm.slane %v524, 3
    %v534 = vmul.f32 %v523, %v526
    %v535 = vmul.f32 %v522, %v527
    %v536 = vmul.f32 %v521, %v528
    %v537 = vmul.f32 %v520, %v529
    %538 = vst [vmem:[#allocation2 + $0x60] sm:$0xff] %v534
    %539 = vst [vmem:[#allocation2 + $0x68] sm:$0xff] %v535
    %540 = vst [vmem:[#allocation2 + $0x70] sm:$0xff] %v536
    %541 = vst [vmem:[#allocation2 + $0x78] sm:$0xff] %v537
    %v542 = vld [vmem:[%s219] ss:$8 sm:$0xf]
    %v544 = vperm.slane %v542, 0
    %v545 = vperm.slane %v542, 1
    %v546 = vperm.slane %v542, 2
    %v547 = vperm.slane %v542, 3
    %v552 = vmul.f32 %v427, %v544
    %v553 = vmul.f32 %v428, %v545
    %v554 = vmul.f32 %v429, %v546
    %v555 = vmul.f32 %v430, %v547
    %556 = vst [vmem:[#allocation2 + $0x80] sm:$0xff] %v552
    %557 = vst [vmem:[#allocation2 + $0x88] sm:$0xff] %v553
    %558 = vst [vmem:[#allocation2 + $0x90] sm:$0xff] %v554
    %559 = vst [vmem:[#allocation2 + $0x98] sm:$0xff] %v555
    %560 = vrot.lane.b32.xlu0 %v427, 127
    %v561 = vpop.permute.xlu0 %560
    %562 = vrot.lane.b32.xlu0 %v428, 127
    %v563 = vpop.permute.xlu0 %562
    %564 = vrot.lane.b32.xlu0 %v429, 127
    %v565 = vpop.permute.xlu0 %564
    %566 = vrot.lane.b32.xlu0 %v430, 127
    %v567 = vpop.permute.xlu0 %566
    %v568 = vsel %vm251, %v565, %v567
    %v569 = vsel %vm251, %v563, %v565
    %v570 = vsel %vm251, %v561, %v563
    %v571 = vsel %vm251, %v567, %v561
    %v572 = vld [vmem:[%s256] ss:$8 sm:$0xf]
    %v574 = vperm.slane %v572, 0
    %v575 = vperm.slane %v572, 1
    %v576 = vperm.slane %v572, 2
    %v577 = vperm.slane %v572, 3
    %v582 = vmul.f32 %v570, %v574
    %v583 = vmul.f32 %v569, %v575
    %v584 = vmul.f32 %v568, %v576
    %v585 = vmul.f32 %v571, %v577
    %586 = vst [vmem:[#allocation2 + $0xa0] sm:$0xff] %v582
    %587 = vst [vmem:[#allocation2 + $0xa8] sm:$0xff] %v583
    %588 = vst [vmem:[#allocation2 + $0xb0] sm:$0xff] %v584
    %589 = vst [vmem:[#allocation2 + $0xb8] sm:$0xff] %v585
    %590 = vrot.lane.b32.xlu0 %v427, 113
    %v591 = vpop.permute.xlu0 %590
    %592 = vrot.lane.b32.xlu0 %v428, 113
    %v593 = vpop.permute.xlu0 %592
    %594 = vrot.lane.b32.xlu0 %v429, 113
    %v595 = vpop.permute.xlu0 %594
    %596 = vrot.lane.b32.xlu0 %v430, 113
    %v597 = vpop.permute.xlu0 %596
    %v598 = vsel %vm295, %v595, %v597
    %v599 = vsel %vm295, %v593, %v595
    %v600 = vsel %vm295, %v591, %v593
    %v601 = vsel %vm295, %v597, %v591
    %v602 = vld [vmem:[%s300] ss:$8 sm:$0xf]
    %v604 = vperm.slane %v602, 0
    %v605 = vperm.slane %v602, 1
    %v606 = vperm.slane %v602, 2
    %v607 = vperm.slane %v602, 3
    %v612 = vmul.f32 %v600, %v604
    %v613 = vmul.f32 %v599, %v605
    %v614 = vmul.f32 %v598, %v606
    %v615 = vmul.f32 %v601, %v607
    %616 = vst [vmem:[#allocation2 + $0xc0] sm:$0xff] %v612
    %617 = vst [vmem:[#allocation2 + $0xc8] sm:$0xff] %v613
    %618 = vst [vmem:[#allocation2 + $0xd0] sm:$0xff] %v614
    %619 = vst [vmem:[#allocation2 + $0xd8] sm:$0xff] %v615
    %620 = vrot.lane.b32.xlu0 %v427, 112
    %v621 = vpop.permute.xlu0 %620
    %622 = vrot.lane.b32.xlu0 %v428, 112
    %v623 = vpop.permute.xlu0 %622
    %624 = vrot.lane.b32.xlu0 %v429, 112
    %v625 = vpop.permute.xlu0 %624
    %626 = vrot.lane.b32.xlu0 %v430, 112
    %v627 = vpop.permute.xlu0 %626
    %v628 = vsel %vm339, %v625, %v627
    %v629 = vsel %vm339, %v623, %v625
    %v630 = vsel %vm339, %v621, %v623
    %v631 = vsel %vm339, %v627, %v621
    %v632 = vld [vmem:[%s344] ss:$8 sm:$0xf]
    %v634 = vperm.slane %v632, 0
    %v635 = vperm.slane %v632, 1
    %v636 = vperm.slane %v632, 2
    %v637 = vperm.slane %v632, 3
    %v642 = vmul.f32 %v630, %v634
    %v643 = vmul.f32 %v629, %v635
    %v644 = vmul.f32 %v628, %v636
    %v645 = vmul.f32 %v631, %v637
    %646 = vst [vmem:[#allocation2 + $0xe0] sm:$0xff] %v642
    %647 = vst [vmem:[#allocation2 + $0xe8] sm:$0xff] %v643
    %648 = vst [vmem:[#allocation2 + $0xf0] sm:$0xff] %v644
    %649 = vst [vmem:[#allocation2 + $0xf8] sm:$0xff] %v645
    %650 = vrot.lane.b32.xlu0 %v427, 111
    %v651 = vpop.permute.xlu0 %650
    %652 = vrot.lane.b32.xlu0 %v428, 111
    %v653 = vpop.permute.xlu0 %652
    %654 = vrot.lane.b32.xlu0 %v429, 111
    %v655 = vpop.permute.xlu0 %654
    %656 = vrot.lane.b32.xlu0 %v430, 111
    %v657 = vpop.permute.xlu0 %656
    %v658 = vsel %vm383, %v655, %v657
    %v659 = vsel %vm383, %v653, %v655
    %v660 = vsel %vm383, %v651, %v653
    %v661 = vsel %vm383, %v657, %v651
    %v662 = vld [vmem:[%s388] ss:$8 sm:$0xf]
    %v664 = vperm.slane %v662, 0
    %v665 = vperm.slane %v662, 1
    %v666 = vperm.slane %v662, 2
    %v667 = vperm.slane %v662, 3
    %v672 = vmul.f32 %v660, %v664
    %v673 = vmul.f32 %v659, %v665
    %v674 = vmul.f32 %v658, %v666
    %v675 = vmul.f32 %v661, %v667
    %676 = vst [vmem:[#allocation2 + $0x100] sm:$0xff] %v672
    %677 = vst [vmem:[#allocation2 + $0x108] sm:$0xff] %v673
    %678 = vst [vmem:[#allocation2 + $0x110] sm:$0xff] %v674
    %679 = vst [vmem:[#allocation2 + $0x118] sm:$0xff] %v675
    %v680 = vld [vmem:[#allocation2] sm:$0xff]
    %v681 = vld [vmem:[#allocation2 + $0x8] sm:$0xff]
    %v682 = vld [vmem:[#allocation2 + $0x10] sm:$0xff]
    %v683 = vld [vmem:[#allocation2 + $0x18] sm:$0xff]
    %v684 = vld [vmem:[#allocation2 + $0x20] sm:$0xff]
    %v685 = vld [vmem:[#allocation2 + $0x28] sm:$0xff]
    %v686 = vld [vmem:[#allocation2 + $0x30] sm:$0xff]
    %v687 = vld [vmem:[#allocation2 + $0x38] sm:$0xff]
    %v688 = vld [vmem:[#allocation2 + $0x40] sm:$0xff]
    %v689 = vld [vmem:[#allocation2 + $0x48] sm:$0xff]
    %v690 = vld [vmem:[#allocation2 + $0x50] sm:$0xff]
    %v691 = vld [vmem:[#allocation2 + $0x58] sm:$0xff]
    %v692 = vld [vmem:[#allocation2 + $0x60] sm:$0xff]
    %v693 = vld [vmem:[#allocation2 + $0x68] sm:$0xff]
    %v694 = vld [vmem:[#allocation2 + $0x70] sm:$0xff]
    %v695 = vld [vmem:[#allocation2 + $0x78] sm:$0xff]
    %v696 = vld [vmem:[#allocation2 + $0x80] sm:$0xff]
    %v697 = vld [vmem:[#allocation2 + $0x88] sm:$0xff]
    %v698 = vld [vmem:[#allocation2 + $0x90] sm:$0xff]
    %v699 = vld [vmem:[#allocation2 + $0x98] sm:$0xff]
    %v700 = vld [vmem:[#allocation2 + $0xa0] sm:$0xff]
    %v701 = vld [vmem:[#allocation2 + $0xa8] sm:$0xff]
    %v702 = vld [vmem:[#allocation2 + $0xb0] sm:$0xff]
    %v703 = vld [vmem:[#allocation2 + $0xb8] sm:$0xff]
    %v704 = vld [vmem:[#allocation2 + $0xc0] sm:$0xff]
    %v705 = vld [vmem:[#allocation2 + $0xc8] sm:$0xff]
    %v706 = vld [vmem:[#allocation2 + $0xd0] sm:$0xff]
    %v707 = vld [vmem:[#allocation2 + $0xd8] sm:$0xff]
    %v708 = vld [vmem:[#allocation2 + $0xe0] sm:$0xff]
    %v709 = vld [vmem:[#allocation2 + $0xe8] sm:$0xff]
    %v710 = vld [vmem:[#allocation2 + $0xf0] sm:$0xff]
    %v711 = vld [vmem:[#allocation2 + $0xf8] sm:$0xff]
    %v712 = vld [vmem:[#allocation2 + $0x100] sm:$0xff]
    %v713 = vld [vmem:[#allocation2 + $0x108] sm:$0xff]
    %v714 = vld [vmem:[#allocation2 + $0x110] sm:$0xff]
    %v715 = vld [vmem:[#allocation2 + $0x118] sm:$0xff]
    %717 = vset.pattern.permute.xlu0 72
    %718 = vperm.xlu0 %717, %v431
    %v719 = vpop.permute.xlu0 %718
    %vm721 = vcmask 588800
    %v722 = vsel %vm721, %v431, 0
    %724 = vmatpush.msra.mxu0 0.0
    %725 = vmatpush.msra.mxu0 0.0
    %726 = vmatpush.msra.mxu0 0.0
    %727 = vmatpush.msra.mxu0 0.0
    %728 = vmatpush.msra.mxu0 0.0
    %729 = vmatpush.msra.mxu0 0.0
    %730 = vmatpush.msra.mxu0 0.0
    %731 = vmatpush.msra.mxu0 %v712
    %732 = vmatpush.msra.mxu0 %v708
    %733 = vmatpush.msra.mxu0 %v704
    %734 = vmatpush.msra.mxu0 %v700
    %735 = vmatpush.msra.mxu0 %v696
    %736 = vmatpush.msra.mxu0 %v692
    %737 = vmatpush.msra.mxu0 %v688
    %738 = vmatpush.msra.mxu0 %v684
    %739 = vmatpush.msra.mxu0 %v680
    %740 = vmatmul.f32.gmra.mxu0 %v722
    %v741 = vpop.f32.mrf.mxu0
    %v742 = vadd.f32 %v719, %v741
    %743 = vdwg.mxu0
    %744 = vmatpush.msra.mxu0 0.0
    %745 = vmatpush.msra.mxu0 0.0
    %746 = vmatpush.msra.mxu0 0.0
    %747 = vmatpush.msra.mxu0 0.0
    %748 = vmatpush.msra.mxu0 0.0
    %749 = vmatpush.msra.mxu0 0.0
    %750 = vmatpush.msra.mxu0 0.0
    %751 = vmatpush.msra.mxu0 %v713
    %752 = vmatpush.msra.mxu0 %v709
    %753 = vmatpush.msra.mxu0 %v705
    %754 = vmatpush.msra.mxu0 %v701
    %755 = vmatpush.msra.mxu0 %v697
    %756 = vmatpush.msra.mxu0 %v693
    %757 = vmatpush.msra.mxu0 %v689
    %758 = vmatpush.msra.mxu0 %v685
    %759 = vmatpush.msra.mxu0 %v681
    %760 = vmatmul.f32.gmra.mxu0 %v722
    %v761 = vpop.f32.mrf.mxu0
    %v762 = vadd.f32 %v719, %v761
    %763 = vdwg.mxu0
    %764 = vmatpush.msra.mxu0 0.0
    %765 = vmatpush.msra.mxu0 0.0
    %766 = vmatpush.msra.mxu0 0.0
    %767 = vmatpush.msra.mxu0 0.0
    %768 = vmatpush.msra.mxu0 0.0
    %769 = vmatpush.msra.mxu0 0.0
    %770 = vmatpush.msra.mxu0 0.0
    %771 = vmatpush.msra.mxu0 %v714
    %772 = vmatpush.msra.mxu0 %v710
    %773 = vmatpush.msra.mxu0 %v706
    %774 = vmatpush.msra.mxu0 %v702
    %775 = vmatpush.msra.mxu0 %v698
    %776 = vmatpush.msra.mxu0 %v694
    %777 = vmatpush.msra.mxu0 %v690
    %778 = vmatpush.msra.mxu0 %v686
    %779 = vmatpush.msra.mxu0 %v682
    %780 = vmatmul.f32.gmra.mxu0 %v722
    %v781 = vpop.f32.mrf.mxu0
    %v782 = vadd.f32 %v719, %v781
    %783 = vdwg.mxu0
    %784 = vmatpush.msra.mxu0 0.0
    %785 = vmatpush.msra.mxu0 0.0
    %786 = vmatpush.msra.mxu0 0.0
    %787 = vmatpush.msra.mxu0 0.0
    %788 = vmatpush.msra.mxu0 0.0
    %789 = vmatpush.msra.mxu0 0.0
    %790 = vmatpush.msra.mxu0 0.0
    %791 = vmatpush.msra.mxu0 %v715
    %792 = vmatpush.msra.mxu0 %v711
    %793 = vmatpush.msra.mxu0 %v707
    %794 = vmatpush.msra.mxu0 %v703
    %795 = vmatpush.msra.mxu0 %v699
    %796 = vmatpush.msra.mxu0 %v695
    %797 = vmatpush.msra.mxu0 %v691
    %798 = vmatpush.msra.mxu0 %v687
    %799 = vmatpush.msra.mxu0 %v683
    %800 = vmatmul.f32.gmra.mxu0 %v722
    %v801 = vpop.f32.mrf.mxu0
    %v802 = vadd.f32 %v719, %v801
    %803 = vdwg.mxu0
    %v804 = vmax.f32 %v742, 0.0
    %v805 = vmax.f32 %v762, 0.0
    %v806 = vmax.f32 %v782, 0.0
    %v807 = vmax.f32 %v802, 0.0
    %v808 = vld [vmem:[%s2 + $0x10] sm:$0x3]
    %810 = vset.pattern.permute.xlu0 8
    %811 = vperm.xlu0 %810, %v808
    %v812 = vpop.permute.xlu0 %811
    %vm814 = vcmask 64512
    %v815 = vsel %vm814, %v808, 0
    %817 = vmatpush.msra.mxu0 0.0
    %818 = vmatpush.msra.mxu0 0.0
    %819 = vmatpush.msra.mxu0 0.0
    %820 = vmatpush.msra.mxu0 0.0
    %821 = vmatpush.msra.mxu0 0.0
    %822 = vmatpush.msra.mxu0 0.0
    %823 = vmatpush.msra.mxu0 0.0
    %824 = vmatpush.msra.mxu0 0.0
    %825 = vmatpush.msra.mxu0 0.0
    %826 = vmatpush.msra.mxu0 0.0
    %827 = vmatpush.msra.mxu0 0.0
    %828 = vmatpush.msra.mxu0 0.0
    %829 = vmatpush.msra.mxu0 0.0
    %830 = vmatpush.msra.mxu0 0.0
    %831 = vmatpush.msra.mxu0 0.0
    %832 = vmatpush.msra.mxu0 %v804
    %833 = vmatmul.f32.gmra.mxu0 %v815
    %v834 = vpop.f32.mrf.mxu0
    %v835 = vadd.f32 %v812, %v834
    %836 = vdwg.mxu0
    %837 = vmatpush.msra.mxu0 0.0
    %838 = vmatpush.msra.mxu0 0.0
    %839 = vmatpush.msra.mxu0 0.0
    %840 = vmatpush.msra.mxu0 0.0
    %841 = vmatpush.msra.mxu0 0.0
    %842 = vmatpush.msra.mxu0 0.0
    %843 = vmatpush.msra.mxu0 0.0
    %844 = vmatpush.msra.mxu0 0.0
    %845 = vmatpush.msra.mxu0 0.0
    %846 = vmatpush.msra.mxu0 0.0
    %847 = vmatpush.msra.mxu0 0.0
    %848 = vmatpush.msra.mxu0 0.0
    %849 = vmatpush.msra.mxu0 0.0
    %850 = vmatpush.msra.mxu0 0.0
    %851 = vmatpush.msra.mxu0 0.0
    %852 = vmatpush.msra.mxu0 %v805
    %853 = vmatmul.f32.gmra.mxu0 %v815
    %v854 = vpop.f32.mrf.mxu0
    %v855 = vadd.f32 %v812, %v854
    %856 = vdwg.mxu0
    %857 = vmatpush.msra.mxu0 0.0
    %858 = vmatpush.msra.mxu0 0.0
    %859 = vmatpush.msra.mxu0 0.0
    %860 = vmatpush.msra.mxu0 0.0
    %861 = vmatpush.msra.mxu0 0.0
    %862 = vmatpush.msra.mxu0 0.0
    %863 = vmatpush.msra.mxu0 0.0
    %864 = vmatpush.msra.mxu0 0.0
    %865 = vmatpush.msra.mxu0 0.0
    %866 = vmatpush.msra.mxu0 0.0
    %867 = vmatpush.msra.mxu0 0.0
    %868 = vmatpush.msra.mxu0 0.0
    %869 = vmatpush.msra.mxu0 0.0
    %870 = vmatpush.msra.mxu0 0.0
    %871 = vmatpush.msra.mxu0 0.0
    %872 = vmatpush.msra.mxu0 %v806
    %873 = vmatmul.f32.gmra.mxu0 %v815
    %v874 = vpop.f32.mrf.mxu0
    %v875 = vadd.f32 %v812, %v874
    %876 = vdwg.mxu0
    %877 = vmatpush.msra.mxu0 0.0
    %878 = vmatpush.msra.mxu0 0.0
    %879 = vmatpush.msra.mxu0 0.0
    %880 = vmatpush.msra.mxu0 0.0
    %881 = vmatpush.msra.mxu0 0.0
    %882 = vmatpush.msra.mxu0 0.0
    %883 = vmatpush.msra.mxu0 0.0
    %884 = vmatpush.msra.mxu0 0.0
    %885 = vmatpush.msra.mxu0 0.0
    %886 = vmatpush.msra.mxu0 0.0
    %887 = vmatpush.msra.mxu0 0.0
    %888 = vmatpush.msra.mxu0 0.0
    %889 = vmatpush.msra.mxu0 0.0
    %890 = vmatpush.msra.mxu0 0.0
    %891 = vmatpush.msra.mxu0 0.0
    %892 = vmatpush.msra.mxu0 %v807
    %893 = vmatmul.f32.gmra.mxu0 %v815
    %v894 = vpop.f32.mrf.mxu0
    %v895 = vadd.f32 %v812, %v894
    %896 = vdwg.mxu0
    %v901 = vrot.slane %v835, 7
    %v902 = vrot.slane %v855, 7
    %v903 = vrot.slane %v875, 7
    %v904 = vrot.slane %v895, 7
    %v909 = vsub.f32 %v835, %v901
    %v910 = vsub.f32 %v855, %v902
    %v911 = vsub.f32 %v875, %v903
    %v912 = vsub.f32 %v895, %v904
    %v913 = vsub.f32 0.0, %v909
    %v914 = vsub.f32 0.0, %v910
    %v915 = vsub.f32 0.0, %v911
    %v916 = vsub.f32 0.0, %v912
    %v917 = vmul.f32 %v913, 1.442695
    %v918 = vpow.pop %v917
    %v919 = vmul.f32 %v914, 1.442695
    %v920 = vpow.pop %v919
    %v921 = vmul.f32 %v915, 1.442695
    %v922 = vpow.pop %v921
    %v923 = vmul.f32 %v916, 1.442695
    %v924 = vpow.pop %v923
    %v925 = vadd.f32 %v918, 1.0
    %v926 = vadd.f32 %v920, 1.0
    %v927 = vadd.f32 %v922, 1.0
    %v928 = vadd.f32 %v924, 1.0
    %v929 = vrcp.pop %v925
    %v930 = vmul.f32 %v925, %v929
    %v931 = vsub.f32 1.0, %v930
    %v932 = vmul.f32 %v929, %v931
    %v933 = vadd.f32 %v929, %v932
    %vm934 = vweird.f32 %v925
    %vm935 = vweird.f32 %v929
    %vm936 = vmor %vm934, %vm935
    %v937 = vsel %vm936, %v929, %v933
    %v938 = vand.u32 2147483647, %v925
    %vm939 = vcmp.eq.f32.partialorder %v938, 8.507059e+37
    %v940 = vand.u32 %v925, 2147483648
    %v941 = vor.u32 1.1754944e-38, %v940
    %v942 = vsel %vm939, %v941, %v937
    %v943 = vmul.f32 1.0, %v942
    %v944 = vrcp.pop %v926
    %v945 = vmul.f32 %v926, %v944
    %v946 = vsub.f32 1.0, %v945
    %v947 = vmul.f32 %v944, %v946
    %v948 = vadd.f32 %v944, %v947
    %vm949 = vweird.f32 %v926
    %vm950 = vweird.f32 %v944
    %vm951 = vmor %vm949, %vm950
    %v952 = vsel %vm951, %v944, %v948
    %v953 = vand.u32 2147483647, %v926
    %vm954 = vcmp.eq.f32.partialorder %v953, 8.507059e+37
    %v955 = vand.u32 %v926, 2147483648
    %v956 = vor.u32 1.1754944e-38, %v955
    %v957 = vsel %vm954, %v956, %v952
    %v958 = vmul.f32 1.0, %v957
    %v959 = vrcp.pop %v927
    %v960 = vmul.f32 %v927, %v959
    %v961 = vsub.f32 1.0, %v960
    %v962 = vmul.f32 %v959, %v961
    %v963 = vadd.f32 %v959, %v962
    %vm964 = vweird.f32 %v927
    %vm965 = vweird.f32 %v959
    %vm966 = vmor %vm964, %vm965
    %v967 = vsel %vm966, %v959, %v963
    %v968 = vand.u32 2147483647, %v927
    %vm969 = vcmp.eq.f32.partialorder %v968, 8.507059e+37
    %v970 = vand.u32 %v927, 2147483648
    %v971 = vor.u32 1.1754944e-38, %v970
    %v972 = vsel %vm969, %v971, %v967
    %v973 = vmul.f32 1.0, %v972
    %v974 = vrcp.pop %v928
    %v975 = vmul.f32 %v928, %v974
    %v976 = vsub.f32 1.0, %v975
    %v977 = vmul.f32 %v974, %v976
    %v978 = vadd.f32 %v974, %v977
    %vm979 = vweird.f32 %v928
    %vm980 = vweird.f32 %v974
    %vm981 = vmor %vm979, %vm980
    %v982 = vsel %vm981, %v974, %v978
    %v983 = vand.u32 2147483647, %v928
    %vm984 = vcmp.eq.f32.partialorder %v983, 8.507059e+37
    %v985 = vand.u32 %v928, 2147483648
    %v986 = vor.u32 1.1754944e-38, %v985
    %v987 = vsel %vm984, %v986, %v982
    %v988 = vmul.f32 1.0, %v987
    %v989 = vsub.f32 1.0, %v943
    %v990 = vsub.f32 1.0, %v958
    %v991 = vsub.f32 1.0, %v973
    %v992 = vsub.f32 1.0, %v988
    %995 = vst [vmem:[#allocation1] sm:$0xff] %v989
    %996 = vst [vmem:[#allocation1 + $0x9] sm:$0xff] %v990
    %s997 = scalar_lea.vmem [#allocation1], 1
    %v998 = vld [vmem:[%s997] ss:$9 sm:$0xff]
    %v1000 = vlaneseq
    %vm1001 = vcmp.ge.s32.totalorder %v1000, 0
    %vm1002 = vcmp.lt.s32.totalorder %v1000, 256
    %vm1003 = vmand %vm1001, %vm1002
    %1004 = vst.msk [vmem:[%s3] ss:$2 sm:$0x3] %vm1003, %v998
    %1007 = vst [vmem:[#allocation1] sm:$0xff] %v943
    %1008 = vst [vmem:[#allocation1 + $0x9] sm:$0xff] %v958
    %s1009 = scalar_lea.vmem [#allocation1], 1
    %v1010 = vld [vmem:[%s1009] ss:$9 sm:$0xff]
    %s1012 = scalar_lea.vmem %s3, 1
    %1013 = vst.msk [vmem:[%s1012] ss:$2 sm:$0x3] %vm1003, %v1010
    %1016 = vst [vmem:[#allocation1] sm:$0xff] %v991
    %1017 = vst [vmem:[#allocation1 + $0x9] sm:$0xff] %v992
    %s1018 = scalar_lea.vmem [#allocation1], 1
    %v1019 = vld [vmem:[%s1018] ss:$9 sm:$0xff]
    %s1021 = scalar_lea.vmem %s3, 4
    %1022 = vst.msk [vmem:[%s1021] ss:$2 sm:$0x3] %vm1003, %v1019
    %1025 = vst [vmem:[#allocation1] sm:$0xff] %v973
    %1026 = vst [vmem:[#allocation1 + $0x9] sm:$0xff] %v988
    %s1027 = scalar_lea.vmem [#allocation1], 1
    %v1028 = vld [vmem:[%s1027] ss:$9 sm:$0xff]
    %s1030 = scalar_lea.vmem %s1021, 1
    %1031 = vst.msk [vmem:[%s1030] ss:$2 sm:$0x3] %vm1003, %v1028
    // Predicated region
    $region18: #{rl_segmentation_forward.1} parent=1 // pred_check
      _
    $region19: #{rl_segmentation_forward.1} parent=1 // pred_check_branch
      %1033 = sbr.rel (0) target = $region21
    $region20: #{rl_segmentation_forward.1} parent=1 // pred_region
      _
    $region21: #{rl_segmentation_forward.1} parent=1 // pred_fallthru
      _
    // Predicated region
    $region22: #{rl_segmentation_forward.1} parent=1 // pred_check
      _
    $region23: #{rl_segmentation_forward.1} parent=1 // pred_check_branch
      %1035 = sbr.rel (0) target = $region25
    $region24: #{rl_segmentation_forward.1} parent=1 // pred_region
      _
    $region25: #{rl_segmentation_forward.1} parent=1 // pred_fallthru
      _
    %1036 = vsyncpa [#allocation4], 1

</llo_original>
